<compile_context>
chip_gen: v6e
topology: v6e:2x2x1
jax: 0.10.0
libtpu: 0.0.40
codegen_flags: <defaults>
</compile_context>

<pallas_src>
import functools

import jax
import jax.numpy as jnp
from jax.experimental import pallas as pl
from jax.experimental.pallas import tpu as pltpu

_EPS = 1e-5


def _residual_block_kernel(x_ref, w1_ref, w2_ref, o_ref, *, H, W, stacked_k):
    # x_ref / o_ref: (1, C, L) with L = H*W (lane-dense).
    # stacked_k:  w*_ref is (C, 9C), K ordered tap-major (ky, kx, c_in).
    # otherwise:  w*_ref is (9, C, C), tap = ky*3 + kx, each tap (C_out, C_in).
    _, C, L = x_ref.shape
    x = x_ref[0].astype(jnp.float32)                      # (C, L)

    # Lane-only reflect-pad edge masks, (1, L): broadcast inside jnp.where.
    pos = jax.lax.broadcasted_iota(jnp.int32, (1, L), 1)
    col = pos % W
    col_first = col == 0
    col_last = col == (W - 1)
    row_first = pos < W
    row_last = pos >= (H - 1) * W

    def col_maps(t):
        # dx = -1 / 0 / +1 column shifts: circular lane rolls + reflect fixups.
        nxt = pltpu.roll(t, L - 1, axis=1)                # t[h, w+1]  (wraps)
        prv = pltpu.roll(t, 1, axis=1)                    # t[h, w-1]  (wraps)
        return (jnp.where(col_first, nxt, prv),           # dx = -1 (reflect @ w=0)
                t,                                        # dx =  0
                jnp.where(col_last, prv, nxt))            # dx = +1 (reflect @ w=W-1)

    def conv3x3(t, w_ref):
        """3x3 conv with reflect pad 1 on flat (C, L) maps -> f32 (C, L)."""
        cd = w_ref.dtype                                  # MXU operand dtype

        if stacked_k:
            # Stacked-K / im2col: one (C, 9C) @ (9C, L) matmul per conv; the 8
            # inter-tap accumulations happen inside the MXU f32 accumulator.
            # Shift network stays f32 (aligned sublane concat), single cast at end.
            shifted = [None] * 9
            for j, cmap in enumerate(col_maps(t)):        # j = dx + 1
                dn = pltpu.roll(cmap, L - W, axis=1)      # cmap[h+1, w]  (wraps)
                up = pltpu.roll(cmap, W, axis=1)          # cmap[h-1, w]  (wraps)
                shifted[0 * 3 + j] = jnp.where(row_first, dn, up)   # dy = -1
                shifted[1 * 3 + j] = cmap                           # dy =  0
                shifted[2 * 3 + j] = jnp.where(row_last, up, dn)    # dy = +1
            stacked = jnp.concatenate(shifted, axis=0).astype(cd)   # (9C, L)
            return jnp.dot(w_ref[...], stacked, preferred_element_type=jnp.float32)

        # Per-tap path (large C): cast the activation once and run the whole
        # roll/where shift network in the matmul dtype; produce each tap's
        # shift immediately before its matmul to keep liveness low.
        # TODO(synk): on v7x, drive the MXU result buffer directly
        # (matmul_push_rhs / matmul_acc_lhs) so the 8 inter-tap adds leave the VPU.
        t = t.astype(cd)

        def mac(acc, w_tap, s):
            d = jnp.dot(w_tap, s, preferred_element_type=jnp.float32)
            return d if acc is None else acc + d

        acc = None
        for j, cmap in enumerate(col_maps(t)):            # j = dx + 1
            dn = pltpu.roll(cmap, L - W, axis=1)
            up = pltpu.roll(cmap, W, axis=1)
            acc = mac(acc, w_ref[0 * 3 + j], jnp.where(row_first, dn, up))  # dy=-1
            acc = mac(acc, w_ref[1 * 3 + j], cmap)                          # dy= 0
            acc = mac(acc, w_ref[2 * 3 + j], jnp.where(row_last, up, dn))   # dy=+1
        return acc

    inv_l = 1.0 / float(L)

    def instance_norm(t):                                 # biased var, eps = 1e-5
        s1 = jnp.sum(t, axis=1, keepdims=True)
        s2 = jnp.sum(t * t, axis=1, keepdims=True)
        mean = s1 * inv_l
        var = jnp.maximum(s2 * inv_l - mean * mean, 0.0)
        return (t - mean) * jax.lax.rsqrt(var + _EPS)

    y = conv3x3(x, w1_ref)
    y = jnp.maximum(instance_norm(y), 0.0)                # nn.ReLU (alt_leak=False)
    y = conv3x3(y, w2_ref)
    y = instance_norm(y)

    o_ref[0] = (x + y).astype(o_ref.dtype)


def _chip_vmem_budget():
    cap = 128 << 20                                       # v5e / v6e physical VMEM
    try:
        cap = int(pltpu.get_tpu_info().vmem_capacity_bytes)   # 64 MiB on v7x
    except Exception:
        pass
    return max(32 << 20, int(cap * 0.85))                 # ~15% headroom


def residual_block(x, w1, b1, w2, b2, *, matmul_dtype=jnp.bfloat16, stacked_k=None):
    """ResidualBlock forward.  x: (N, C, H, W); w*: (C, C, 3, 3); b*: (C,).

    b1 / b2 are accepted to mirror the PyTorch module's parameters but are not
    used: both convs feed an affine-free InstanceNorm, which removes any
    per-channel constant, so the conv biases are mathematically no-ops.

    matmul_dtype=bfloat16 (default) feeds the MXU its native operand width on
    every TPU generation (f32 matmul is multi-pass / emulated); accumulation is
    f32 and all IN / ReLU / residual math stays f32.  Pass jnp.float32 for
    bit-tight parity with the f32 reference.
    """
    del b1, b2
    N, C, H, W = x.shape
    assert H >= 2 and W >= 2, "ReflectionPad2d(1) requires H, W >= 2"
    L = H * W
    x_flat = x.reshape(N, C, L)

    if stacked_k is None:
        # Stacked-K fills the MXU K dim when C is small; require sublane-aligned
        # C so the 9-way channel concatenate is an aligned (cheap) concat.
        stacked_k = (C % 8 == 0) and (9 * C <= 2048)

    if stacked_k:
        # (C_out, C_in, ky, kx) -> (C_out, ky, kx, C_in) -> (C_out, 9*C_in);
        # K ordered tap-major to match jnp.concatenate(shifted, axis=0).
        def prep_w(w):
            return jnp.transpose(w, (0, 2, 3, 1)).reshape(C, 9 * C).astype(matmul_dtype)
        w_spec = pl.BlockSpec((C, 9 * C), lambda n: (0, 0))
    else:
        # (C_out, C_in, ky, kx) -> (9, C_out, C_in), tap = ky*3 + kx.
        def prep_w(w):
            return jnp.transpose(w, (2, 3, 0, 1)).reshape(9, C, C).astype(matmul_dtype)
        w_spec = pl.BlockSpec((9, C, C), lambda n: (0, 0, 0))

    w1_t, w2_t = prep_w(w1), prep_w(w2)

    # VMEM budget recomputed after the liveness fixes: double-buffered in/out
    # image blocks + resident weights + the handful of live (C, L) temporaries,
    # clamped to a chip-aware cap with headroom.
    mm = jnp.dtype(matmul_dtype).itemsize
    img32 = C * L * 4
    imgmm = C * L * mm
    body = (4 * img32 + 13 * imgmm) if stacked_k else (4 * img32 + 8 * imgmm)
    needed = 4 * img32 + body + 2 * 9 * C * C * mm + (1 << 20)
    vmem_limit = int(min(max(needed, 32 << 20), _chip_vmem_budget()))

    # TODO(synk): for v7x-sized problems (C >= 256, H, W >= 64) add an H-strip
    # grid axis with a 1-row halo and cross-strip IN statistics so the per-step
    # footprint fits 64 MiB VMEM and both TensorCores stay busy at N=1.
    # TODO(synk): where the layout allows, pad W so the +/-W row rolls are
    # 128-lane aligned (whole-vreg moves instead of intra-vreg XLU rotations).

    kernel = functools.partial(_residual_block_kernel, H=H, W=W, stacked_k=stacked_k)
    out_flat = pl.pallas_call(
        kernel,
        out_shape=jax.ShapeDtypeStruct((N, C, L), x.dtype),
        grid_spec=pltpu.PrefetchScalarGridSpec(
            num_scalar_prefetch=0,
            grid=(N,),
            in_specs=[
                pl.BlockSpec((1, C, L), lambda n: (n, 0, 0)),
                w_spec,
                w_spec,
            ],
            out_specs=pl.BlockSpec((1, C, L), lambda n: (n, 0, 0)),
        ),
        compiler_params=pltpu.CompilerParams(
            dimension_semantics=("parallel",),
            vmem_limit_bytes=vmem_limit),
    )(x_flat, w1_t, w2_t)
    return out_flat.reshape(N, C, H, W)


def _reference(x, w1, b1, w2, b2):
    """Pure-JAX reference matching the PyTorch module."""

    def rpad(t):
        return jnp.pad(t, ((0, 0), (0, 0), (1, 1), (1, 1)), mode="reflect")

    def conv(t, w, b):
        y = jax.lax.conv_general_dilated(
            rpad(t), w, window_strides=(1, 1), padding="VALID",
            dimension_numbers=("NCHW", "OIHW", "NCHW"))
        return y + b[None, :, None, None]

    def inorm(t):
        mean = jnp.mean(t, axis=(2, 3), keepdims=True)
        var = jnp.mean((t - mean) ** 2, axis=(2, 3), keepdims=True)
        return (t - mean) * jax.lax.rsqrt(var + _EPS)

    y = jnp.maximum(inorm(conv(x, w1, b1)), 0.0)
    y = inorm(conv(y, w2, b2))
    return x + y


if __name__ == "__main__":
    key = jax.random.PRNGKey(0)
    N, C, H, W = 2, 8, 16, 16
    kx, kw1, kb1, kw2, kb2 = jax.random.split(key, 5)

    x = jax.random.normal(kx, (N, C, H, W), dtype=jnp.float32)
    # Synthetic Conv2d(C, C, 3) weights/biases.
    w1 = 0.1 * jax.random.normal(kw1, (C, C, 3, 3), dtype=jnp.float32)
    b1 = 0.1 * jax.random.normal(kb1, (C,), dtype=jnp.float32)
    w2 = 0.1 * jax.random.normal(kw2, (C, C, 3, 3), dtype=jnp.float32)
    b2 = 0.1 * jax.random.normal(kb2, (C,), dtype=jnp.float32)

    ref = _reference(x, w1, b1, w2, b2)

    # 1) Default config: bf16 MXU operands, stacked-K (small-C) path.
    #    bf16 operands diverge from the f32 reference; tolerance widened
    #    deliberately (accumulation and IN/ReLU/residual are still f32).
    out = jax.block_until_ready(residual_block(x, w1, b1, w2, b2))
    assert out.shape == (N, C, H, W)
    err = float(jnp.max(jnp.abs(out - ref)))
    assert err < 5e-2, err

    # 2) f32 MXU operands, per-tap accumulation path: tight parity check.
    out32 = jax.block_until_ready(
        residual_block(x, w1, b1, w2, b2,
                       matmul_dtype=jnp.float32, stacked_k=False))
    err32 = float(jnp.max(jnp.abs(out32 - ref)))
    assert err32 < 2e-4, err32

    # 3) bf16 + per-tap path (the large-C production configuration).
    out_pt = jax.block_until_ready(
        residual_block(x, w1, b1, w2, b2, stacked_k=False))
    err_pt = float(jnp.max(jnp.abs(out_pt - ref)))
    assert err_pt < 5e-2, err_pt

    print("KERNEL_OK")
</pallas_src>

<mosaic_0001>
module attributes {stable_mosaic.version = 11 : i64} {
  func.func @_residual_block_kernel(%arg0: i32, %arg1: memref<1x8x256xf32, #tpu.memory_space<vmem>>, %arg2: memref<8x72xbf16, #tpu.memory_space<vmem>>, %arg3: memref<8x72xbf16, #tpu.memory_space<vmem>>, %arg4: memref<1x8x256xf32, #tpu.memory_space<vmem>>) attributes {dimension_semantics = [#tpu.dimension_semantics<parallel>], iteration_bounds = array<i64: 2>, scalar_prefetch = 0 : i64, scratch_operands = 0 : i64, tpu.core_type = #tpu.core_type<tc>, window_params = [{transform_indices = @transform_0, window_bounds = array<i64: 1, 8, 256>}, {pipeline_mode = #tpu.pipeline_mode<synchronous>, transform_indices = @transform_1, window_bounds = array<i64: 8, 72>}, {pipeline_mode = #tpu.pipeline_mode<synchronous>, transform_indices = @transform_2, window_bounds = array<i64: 8, 72>}, {transform_indices = @transform_3, window_bounds = array<i64: 1, 8, 256>}]} {
    %c0 = arith.constant 0 : index
    %c0_0 = arith.constant 0 : index
    %c0_1 = arith.constant 0 : index
    %0 = vector.load %arg1[%c0, %c0_0, %c0_1] : memref<1x8x256xf32, #tpu.memory_space<vmem>>, vector<1x8x256xf32>
    %1 = vector.shape_cast %0 : vector<1x8x256xf32> to vector<8x256xf32>
    %2 = tpu.iota {dimensions = array<i32: 1>} : vector<1x256xi32>
    %c16_i32 = arith.constant 16 : i32
    %c0_i32 = arith.constant 0 : i32
    %3 = arith.cmpi eq, %c16_i32, %c0_i32 : i32
    %c1_i32 = arith.constant 1 : i32
    %4 = arith.select %3, %c1_i32, %c16_i32 : i32
    %5 = vector.broadcast %4 : i32 to vector<1x256xi32>
    %6 = arith.remsi %2, %5 : vector<1x256xi32>
    %c0_i32_2 = arith.constant 0 : i32
    %7 = vector.broadcast %c0_i32_2 : i32 to vector<1x256xi32>
    %8 = arith.cmpi ne, %6, %7 : vector<1x256xi32>
    %c0_i32_3 = arith.constant 0 : i32
    %9 = vector.broadcast %c0_i32_3 : i32 to vector<1x256xi32>
    %10 = arith.cmpi slt, %6, %9 : vector<1x256xi32>
    %c0_i32_4 = arith.constant 0 : i32
    %11 = arith.cmpi slt, %4, %c0_i32_4 : i32
    %12 = vector.broadcast %11 : i1 to vector<1x256xi1>
    %13 = vector.broadcast %12 : vector<1x256xi1> to vector<1x256xi1>
    %14 = arith.xori %10, %13 : vector<1x256xi1>
    %15 = arith.andi %14, %8 : vector<1x256xi1>
    %16 = vector.broadcast %4 : i32 to vector<1x256xi32>
    %17 = arith.addi %6, %16 : vector<1x256xi32>
    %18 = arith.select %15, %17, %6 : vector<1x256xi1>, vector<1x256xi32>
    %c0_i32_5 = arith.constant 0 : i32
    %19 = vector.broadcast %c0_i32_5 : i32 to vector<1x256xi32>
    %20 = arith.cmpi eq, %18, %19 : vector<1x256xi32>
    %c15_i32 = arith.constant 15 : i32
    %21 = vector.broadcast %c15_i32 : i32 to vector<1x256xi32>
    %22 = arith.cmpi eq, %18, %21 : vector<1x256xi32>
    %c16_i32_6 = arith.constant 16 : i32
    %23 = vector.broadcast %c16_i32_6 : i32 to vector<1x256xi32>
    %24 = arith.cmpi slt, %2, %23 : vector<1x256xi32>
    %c240_i32 = arith.constant 240 : i32
    %25 = vector.broadcast %c240_i32 : i32 to vector<1x256xi32>
    %26 = arith.cmpi sge, %2, %25 : vector<1x256xi32>
    %c255_i32 = arith.constant 255 : i32
    %27 = tpu.dynamic_rotate %1 by %c255_i32 dim 1 : vector<8x256xf32>, i32 -> vector<8x256xf32>
    %c1_i32_7 = arith.constant 1 : i32
    %28 = tpu.dynamic_rotate %1 by %c1_i32_7 dim 1 : vector<8x256xf32>, i32 -> vector<8x256xf32>
    %29 = vector.shape_cast %20 : vector<1x256xi1> to vector<1x256xi1>
    %30 = vector.broadcast %29 : vector<1x256xi1> to vector<8x256xi1>
    %31 = arith.select %30, %27, %28 : vector<8x256xi1>, vector<8x256xf32>
    %32 = vector.shape_cast %22 : vector<1x256xi1> to vector<1x256xi1>
    %33 = vector.broadcast %32 : vector<1x256xi1> to vector<8x256xi1>
    %34 = arith.select %33, %28, %27 : vector<8x256xi1>, vector<8x256xf32>
    %c240_i32_8 = arith.constant 240 : i32
    %35 = tpu.dynamic_rotate %31 by %c240_i32_8 dim 1 : vector<8x256xf32>, i32 -> vector<8x256xf32>
    %c16_i32_9 = arith.constant 16 : i32
    %36 = tpu.dynamic_rotate %31 by %c16_i32_9 dim 1 : vector<8x256xf32>, i32 -> vector<8x256xf32>
    %37 = vector.shape_cast %24 : vector<1x256xi1> to vector<1x256xi1>
    %38 = vector.broadcast %37 : vector<1x256xi1> to vector<8x256xi1>
    %39 = arith.select %38, %35, %36 : vector<8x256xi1>, vector<8x256xf32>
    %40 = vector.shape_cast %26 : vector<1x256xi1> to vector<1x256xi1>
    %41 = vector.broadcast %40 : vector<1x256xi1> to vector<8x256xi1>
    %42 = arith.select %41, %36, %35 : vector<8x256xi1>, vector<8x256xf32>
    %c240_i32_10 = arith.constant 240 : i32
    %43 = tpu.dynamic_rotate %1 by %c240_i32_10 dim 1 : vector<8x256xf32>, i32 -> vector<8x256xf32>
    %c16_i32_11 = arith.constant 16 : i32
    %44 = tpu.dynamic_rotate %1 by %c16_i32_11 dim 1 : vector<8x256xf32>, i32 -> vector<8x256xf32>
    %45 = vector.shape_cast %24 : vector<1x256xi1> to vector<1x256xi1>
    %46 = vector.broadcast %45 : vector<1x256xi1> to vector<8x256xi1>
    %47 = arith.select %46, %43, %44 : vector<8x256xi1>, vector<8x256xf32>
    %48 = vector.shape_cast %26 : vector<1x256xi1> to vector<1x256xi1>
    %49 = vector.broadcast %48 : vector<1x256xi1> to vector<8x256xi1>
    %50 = arith.select %49, %44, %43 : vector<8x256xi1>, vector<8x256xf32>
    %c240_i32_12 = arith.constant 240 : i32
    %51 = tpu.dynamic_rotate %34 by %c240_i32_12 dim 1 : vector<8x256xf32>, i32 -> vector<8x256xf32>
    %c16_i32_13 = arith.constant 16 : i32
    %52 = tpu.dynamic_rotate %34 by %c16_i32_13 dim 1 : vector<8x256xf32>, i32 -> vector<8x256xf32>
    %53 = vector.shape_cast %24 : vector<1x256xi1> to vector<1x256xi1>
    %54 = vector.broadcast %53 : vector<1x256xi1> to vector<8x256xi1>
    %55 = arith.select %54, %51, %52 : vector<8x256xi1>, vector<8x256xf32>
    %56 = vector.shape_cast %26 : vector<1x256xi1> to vector<1x256xi1>
    %57 = vector.broadcast %56 : vector<1x256xi1> to vector<8x256xi1>
    %58 = arith.select %57, %52, %51 : vector<8x256xi1>, vector<8x256xf32>
    %59 = tpu.concatenate %39, %47, %55, %31, %1, %34, %42, %50, %58 in 0 : vector<8x256xf32>, vector<8x256xf32>, vector<8x256xf32>, vector<8x256xf32>, vector<8x256xf32>, vector<8x256xf32>, vector<8x256xf32>, vector<8x256xf32>, vector<8x256xf32> -> vector<72x256xf32>
    %60 = arith.truncf %59 : vector<72x256xf32> to vector<72x256xbf16>
    %c0_14 = arith.constant 0 : index
    %c0_15 = arith.constant 0 : index
    %61 = vector.load %arg2[%c0_14, %c0_15] : memref<8x72xbf16, #tpu.memory_space<vmem>>, vector<8x72xbf16>
    %cst = arith.constant dense<0.000000e+00> : vector<8x256xf32>
    %62 = tpu.matmul %61, %60, %cst {dimension_numbers = #tpu.dot_dimension_numbers<[1], [0], [0], [1], [0, 0, 1, 1], [], []>} : vector<8x72xbf16>, vector<72x256xbf16>, vector<8x256xf32> -> vector<8x256xf32>
    %cst_16 = arith.constant dense<0.000000e+00> : vector<8xf32>
    %63 = vector.multi_reduction <add>, %62, %cst_16 [1] : vector<8x256xf32> to vector<8xf32>
    %64 = vector.shape_cast %63 : vector<8xf32> to vector<8x1xf32>
    %65 = arith.mulf %62, %62 : vector<8x256xf32>
    %cst_17 = arith.constant dense<0.000000e+00> : vector<8xf32>
    %66 = vector.multi_reduction <add>, %65, %cst_17 [1] : vector<8x256xf32> to vector<8xf32>
    %67 = vector.shape_cast %66 : vector<8xf32> to vector<8x1xf32>
    %cst_18 = arith.constant 3.906250e-03 : f32
    %68 = vector.broadcast %cst_18 : f32 to vector<8x1xf32>
    %69 = arith.mulf %64, %68 : vector<8x1xf32>
    %cst_19 = arith.constant 3.906250e-03 : f32
    %70 = vector.broadcast %cst_19 : f32 to vector<8x1xf32>
    %71 = arith.mulf %67, %70 : vector<8x1xf32>
    %72 = arith.mulf %69, %69 : vector<8x1xf32>
    %73 = arith.subf %71, %72 : vector<8x1xf32>
    %cst_20 = arith.constant 0.000000e+00 : f32
    %74 = vector.broadcast %cst_20 : f32 to vector<8x1xf32>
    %75 = arith.maximumf %73, %74 : vector<8x1xf32>
    %76 = vector.broadcast %69 : vector<8x1xf32> to vector<8x256xf32>
    %77 = arith.subf %62, %76 : vector<8x256xf32>
    %cst_21 = arith.constant 9.99999974E-6 : f32
    %78 = vector.broadcast %cst_21 : f32 to vector<8x1xf32>
    %79 = arith.addf %75, %78 : vector<8x1xf32>
    %80 = math.rsqrt %79 : vector<8x1xf32>
    %81 = vector.broadcast %80 : vector<8x1xf32> to vector<8x256xf32>
    %82 = arith.mulf %77, %81 : vector<8x256xf32>
    %cst_22 = arith.constant 0.000000e+00 : f32
    %83 = vector.broadcast %cst_22 : f32 to vector<8x256xf32>
    %84 = arith.maximumf %82, %83 : vector<8x256xf32>
    %c255_i32_23 = arith.constant 255 : i32
    %85 = tpu.dynamic_rotate %84 by %c255_i32_23 dim 1 : vector<8x256xf32>, i32 -> vector<8x256xf32>
    %c1_i32_24 = arith.constant 1 : i32
    %86 = tpu.dynamic_rotate %84 by %c1_i32_24 dim 1 : vector<8x256xf32>, i32 -> vector<8x256xf32>
    %87 = vector.shape_cast %20 : vector<1x256xi1> to vector<1x256xi1>
    %88 = vector.broadcast %87 : vector<1x256xi1> to vector<8x256xi1>
    %89 = arith.select %88, %85, %86 : vector<8x256xi1>, vector<8x256xf32>
    %90 = vector.shape_cast %22 : vector<1x256xi1> to vector<1x256xi1>
    %91 = vector.broadcast %90 : vector<1x256xi1> to vector<8x256xi1>
    %92 = arith.select %91, %86, %85 : vector<8x256xi1>, vector<8x256xf32>
    %c240_i32_25 = arith.constant 240 : i32
    %93 = tpu.dynamic_rotate %89 by %c240_i32_25 dim 1 : vector<8x256xf32>, i32 -> vector<8x256xf32>
    %c16_i32_26 = arith.constant 16 : i32
    %94 = tpu.dynamic_rotate %89 by %c16_i32_26 dim 1 : vector<8x256xf32>, i32 -> vector<8x256xf32>
    %95 = vector.shape_cast %24 : vector<1x256xi1> to vector<1x256xi1>
    %96 = vector.broadcast %95 : vector<1x256xi1> to vector<8x256xi1>
    %97 = arith.select %96, %93, %94 : vector<8x256xi1>, vector<8x256xf32>
    %98 = vector.shape_cast %26 : vector<1x256xi1> to vector<1x256xi1>
    %99 = vector.broadcast %98 : vector<1x256xi1> to vector<8x256xi1>
    %100 = arith.select %99, %94, %93 : vector<8x256xi1>, vector<8x256xf32>
    %c240_i32_27 = arith.constant 240 : i32
    %101 = tpu.dynamic_rotate %84 by %c240_i32_27 dim 1 : vector<8x256xf32>, i32 -> vector<8x256xf32>
    %c16_i32_28 = arith.constant 16 : i32
    %102 = tpu.dynamic_rotate %84 by %c16_i32_28 dim 1 : vector<8x256xf32>, i32 -> vector<8x256xf32>
    %103 = vector.shape_cast %24 : vector<1x256xi1> to vector<1x256xi1>
    %104 = vector.broadcast %103 : vector<1x256xi1> to vector<8x256xi1>
    %105 = arith.select %104, %101, %102 : vector<8x256xi1>, vector<8x256xf32>
    %106 = vector.shape_cast %26 : vector<1x256xi1> to vector<1x256xi1>
    %107 = vector.broadcast %106 : vector<1x256xi1> to vector<8x256xi1>
    %108 = arith.select %107, %102, %101 : vector<8x256xi1>, vector<8x256xf32>
    %c240_i32_29 = arith.constant 240 : i32
    %109 = tpu.dynamic_rotate %92 by %c240_i32_29 dim 1 : vector<8x256xf32>, i32 -> vector<8x256xf32>
    %c16_i32_30 = arith.constant 16 : i32
    %110 = tpu.dynamic_rotate %92 by %c16_i32_30 dim 1 : vector<8x256xf32>, i32 -> vector<8x256xf32>
    %111 = vector.shape_cast %24 : vector<1x256xi1> to vector<1x256xi1>
    %112 = vector.broadcast %111 : vector<1x256xi1> to vector<8x256xi1>
    %113 = arith.select %112, %109, %110 : vector<8x256xi1>, vector<8x256xf32>
    %114 = vector.shape_cast %26 : vector<1x256xi1> to vector<1x256xi1>
    %115 = vector.broadcast %114 : vector<1x256xi1> to vector<8x256xi1>
    %116 = arith.select %115, %110, %109 : vector<8x256xi1>, vector<8x256xf32>
    %117 = tpu.concatenate %97, %105, %113, %89, %84, %92, %100, %108, %116 in 0 : vector<8x256xf32>, vector<8x256xf32>, vector<8x256xf32>, vector<8x256xf32>, vector<8x256xf32>, vector<8x256xf32>, vector<8x256xf32>, vector<8x256xf32>, vector<8x256xf32> -> vector<72x256xf32>
    %118 = arith.truncf %117 : vector<72x256xf32> to vector<72x256xbf16>
    %c0_31 = arith.constant 0 : index
    %c0_32 = arith.constant 0 : index
    %119 = vector.load %arg3[%c0_31, %c0_32] : memref<8x72xbf16, #tpu.memory_space<vmem>>, vector<8x72xbf16>
    %cst_33 = arith.constant dense<0.000000e+00> : vector<8x256xf32>
    %120 = tpu.matmul %119, %118, %cst_33 {dimension_numbers = #tpu.dot_dimension_numbers<[1], [0], [0], [1], [0, 0, 1, 1], [], []>} : vector<8x72xbf16>, vector<72x256xbf16>, vector<8x256xf32> -> vector<8x256xf32>
    %cst_34 = arith.constant dense<0.000000e+00> : vector<8xf32>
    %121 = vector.multi_reduction <add>, %120, %cst_34 [1] : vector<8x256xf32> to vector<8xf32>
    %122 = vector.shape_cast %121 : vector<8xf32> to vector<8x1xf32>
    %123 = arith.mulf %120, %120 : vector<8x256xf32>
    %cst_35 = arith.constant dense<0.000000e+00> : vector<8xf32>
    %124 = vector.multi_reduction <add>, %123, %cst_35 [1] : vector<8x256xf32> to vector<8xf32>
    %125 = vector.shape_cast %124 : vector<8xf32> to vector<8x1xf32>
    %cst_36 = arith.constant 3.906250e-03 : f32
    %126 = vector.broadcast %cst_36 : f32 to vector<8x1xf32>
    %127 = arith.mulf %122, %126 : vector<8x1xf32>
    %cst_37 = arith.constant 3.906250e-03 : f32
    %128 = vector.broadcast %cst_37 : f32 to vector<8x1xf32>
    %129 = arith.mulf %125, %128 : vector<8x1xf32>
    %130 = arith.mulf %127, %127 : vector<8x1xf32>
    %131 = arith.subf %129, %130 : vector<8x1xf32>
    %cst_38 = arith.constant 0.000000e+00 : f32
    %132 = vector.broadcast %cst_38 : f32 to vector<8x1xf32>
    %133 = arith.maximumf %131, %132 : vector<8x1xf32>
    %134 = vector.broadcast %127 : vector<8x1xf32> to vector<8x256xf32>
    %135 = arith.subf %120, %134 : vector<8x256xf32>
    %cst_39 = arith.constant 9.99999974E-6 : f32
    %136 = vector.broadcast %cst_39 : f32 to vector<8x1xf32>
    %137 = arith.addf %133, %136 : vector<8x1xf32>
    %138 = math.rsqrt %137 : vector<8x1xf32>
    %139 = vector.broadcast %138 : vector<8x1xf32> to vector<8x256xf32>
    %140 = arith.mulf %135, %139 : vector<8x256xf32>
    %141 = arith.addf %1, %140 : vector<8x256xf32>
    %c0_40 = arith.constant 0 : index
    %c0_41 = arith.constant 0 : index
    %c0_42 = arith.constant 0 : index
    %142 = vector.load %arg4[%c0_40, %c0_41, %c0_42] : memref<1x8x256xf32, #tpu.memory_space<vmem>>, vector<1x8x256xf32>
    %143 = vector.shape_cast %142 : vector<1x8x256xf32> to vector<8x256xf32>
    %144 = vector.shape_cast %141 : vector<8x256xf32> to vector<1x8x256xf32>
    tpu.vector_store %arg4[%c0_40, %c0_41, %c0_42], %144 {strides = array<i32>} : memref<1x8x256xf32, #tpu.memory_space<vmem>>, vector<1x8x256xf32>,
    return
  }
  func.func @transform_0(%arg0: i32) -> (i32, i32, i32) {
    %c0_i32 = arith.constant 0 : i32
    %c0_i32_0 = arith.constant 0 : i32
    %c0_i32_1 = arith.constant 0 : i32
    return %arg0, %c0_i32, %c0_i32_0 : i32, i32, i32
  }
  func.func @transform_1(%arg0: i32) -> (i32, i32) {
    %c0_i32 = arith.constant 0 : i32
    %c0_i32_0 = arith.constant 0 : i32
    %c0_i32_1 = arith.constant 0 : i32
    return %c0_i32, %c0_i32_0 : i32, i32
  }
  func.func @transform_2(%arg0: i32) -> (i32, i32) {
    %c0_i32 = arith.constant 0 : i32
    %c0_i32_0 = arith.constant 0 : i32
    %c0_i32_1 = arith.constant 0 : i32
    return %c0_i32, %c0_i32_0 : i32, i32
  }
  func.func @transform_3(%arg0: i32) -> (i32, i32, i32) {
    %c0_i32 = arith.constant 0 : i32
    %c0_i32_0 = arith.constant 0 : i32
    %c0_i32_1 = arith.constant 0 : i32
    return %arg0, %c0_i32, %c0_i32_0 : i32, i32, i32
  }
}

</mosaic_0001>

<llo_original>
// kernel: tpu_custom_call.1
$region0: #{tpu_custom_call.1}
  #allocation0 [shape = 'u32[]', space=smem, size = 0x4, offset = 0x4, fixed_abs, tag = 'smem constant byte address 0x4 - core index']
  #allocation1 [shape = 'u32[144,128]{1,0:T(1,128)}', space=vmem, size = 0x12000, scoped, tag = 'internal scratch']
  %s0 = inlined_call_operand.hbm [shape: f32[2,8,256], index: 0, kind: input, shape index: {}]
  %s1 = inlined_call_operand.hbm [shape: bf16[8,72], index: 1, kind: input, shape index: {}]
  %s2 = inlined_call_operand.hbm [shape: bf16[8,72], index: 2, kind: input, shape index: {}]
  %s3 = inlined_call_operand.hbm [shape: f32[2,8,256], index: 3, kind: output, shape index: {}]
  %s4 = sld [smem:[#allocation0]]
  $region57: #{tpu_custom_call.1} parent=0
    _
  %s6 = ssub.s32 1, %s4
  %s7 = scalar_select 0, %s6, %s4
  $region1: #{tpu_custom_call.1} parent=0
    #allocation2 [shape = 'u8[16384]{0}', space=vmem, size = 0x4000, scoped, tag = 'input window, operand 0']
    #allocation3 [shape = 's32[2]{0}', space=sflag, size = 0x8, scoped, tag = 'scoped memory for tpu_custom_call.1']
    #allocation4 [shape = 's32[2]{0}', space=sflag, size = 0x8, scoped, tag = 'scoped memory for tpu_custom_call.1']
    #allocation5 [shape = 'u8[2048]{0}', space=vmem, size = 0x800, scoped, tag = 'input window, operand 1, single buffered']
    #allocation6 [shape = 's32[1]{0}', space=sflag, size = 0x4, scoped, tag = 'scoped memory for tpu_custom_call.1']
    #allocation7 [shape = 'u8[2048]{0}', space=vmem, size = 0x800, scoped, tag = 'input window, operand 2, single buffered']
    #allocation8 [shape = 'u8[16384]{0}', space=vmem, size = 0x4000, scoped, tag = 'output window, operand 0']
    %8 = vsyncpa [#allocation3], 0
    %s9 = scalar_lea.sflag [#allocation3], 1
    %10 = vsyncpa %s9, 0
    %11 = vsyncpa [#allocation6], 0
    %12 = vsyncpa [#allocation4], 0
    %s13 = scalar_lea.sflag [#allocation4], 1
    %14 = vsyncpa %s13, 0
    loop: start=0, step=1, limit=4
    $region2: #{tpu_custom_call.1} parent=1 // loop_pre_header
      _
    $region3: #{tpu_custom_call.1} parent=1 // loop_header
      %s16 = sphi 0, %s20
      %p17 = scmp.ge.s32.totalorder %s16, 4
      %s26 = sphi 0, %s28
      %s29 = sphi 0, %s26
      %s30 = sphi 0, %s29
      %s46 = sphi 0, %s30
      %s50 = sphi 0, %s50
      %s52 = sphi 0, %s50
      %s53 = sphi 0, %s52
      %s67 = sphi 0, %s53
      %s71 = sphi 0, %s71
      %s73 = sphi 0, %s71
      %s74 = sphi 0, %s73
      %s88 = sphi 0, %s74
      %s94 = sphi 0, %s96
      %s97 = sphi 0, %s94
      %s98 = sphi 0, %s97
      %s114 = sphi 0, %s98
    $region4: #{tpu_custom_call.1} parent=1 // loop_header_branch
      %19 = sbr.rel (%p17) target = $region8
    $region5: #{tpu_custom_call.1} parent=1 // loop_body
      %s21 = ssub.s32 %s16, 1
      %s22 = ssub.s32 %s16, 2
      %s23 = sadd.s32 %s16, 1
      %s24 = ssub.s32 %s16, %s23
      %p25 = scmp.eq.s32.totalorder %s24, 0
      %s27 = sadd.s32 %s26, 1
      %s28 = scalar_select %p25, %s26, %s27
      %p31 = pneg %p25
      %p32 = scmp.eq.s32.totalorder %s16, 1
      %p33 = por %p31, %p32
      %p34 = scmp.ne.s32.totalorder %s26, %s29
      %p35 = scmp.eq.s32.totalorder %s16, 0
      %p36 = por %p34, %p35
      %p37 = scmp.ne.s32.totalorder %s26, %s29
      %p38 = scmp.eq.s32.totalorder %s21, 1
      %p39 = por %p37, %p38
      %p40 = scmp.ne.s32.totalorder %s29, %s30
      %p41 = scmp.eq.s32.totalorder %s21, 0
      %p42 = por %p40, %p41
      %p43 = scmp.ne.s32.totalorder %s29, %s30
      %p44 = scmp.eq.s32.totalorder %s22, 1
      %p45 = por %p43, %p44
      %p47 = scmp.ne.s32.totalorder %s30, %s46
      %p48 = scmp.eq.s32.totalorder %s22, 0
      %p49 = por %p47, %p48
      %s51 = sadd.s32 %s50, 1
      %p54 = scmp.eq.s32.totalorder %s16, 1
      %p55 = scmp.ne.s32.totalorder %s50, %s52
      %p56 = scmp.eq.s32.totalorder %s16, 0
      %p57 = por %p55, %p56
      %p58 = scmp.ne.s32.totalorder %s50, %s52
      %p59 = scmp.eq.s32.totalorder %s21, 1
      %p60 = por %p58, %p59
      %p61 = scmp.ne.s32.totalorder %s52, %s53
      %p62 = scmp.eq.s32.totalorder %s21, 0
      %p63 = por %p61, %p62
      %p64 = scmp.ne.s32.totalorder %s52, %s53
      %p65 = scmp.eq.s32.totalorder %s22, 1
      %p66 = por %p64, %p65
      %p68 = scmp.ne.s32.totalorder %s53, %s67
      %p69 = scmp.eq.s32.totalorder %s22, 0
      %p70 = por %p68, %p69
      %s72 = sadd.s32 %s71, 1
      %p75 = scmp.eq.s32.totalorder %s16, 1
      %p76 = scmp.ne.s32.totalorder %s71, %s73
      %p77 = scmp.eq.s32.totalorder %s16, 0
      %p78 = por %p76, %p77
      %p79 = scmp.ne.s32.totalorder %s71, %s73
      %p80 = scmp.eq.s32.totalorder %s21, 1
      %p81 = por %p79, %p80
      %p82 = scmp.ne.s32.totalorder %s73, %s74
      %p83 = scmp.eq.s32.totalorder %s21, 0
      %p84 = por %p82, %p83
      %p85 = scmp.ne.s32.totalorder %s73, %s74
      %p86 = scmp.eq.s32.totalorder %s22, 1
      %p87 = por %p85, %p86
      %p89 = scmp.ne.s32.totalorder %s74, %s88
      %p90 = scmp.eq.s32.totalorder %s22, 0
      %p91 = por %p89, %p90
      %s92 = ssub.s32 %s16, %s23
      %p93 = scmp.eq.s32.totalorder %s92, 0
      %s95 = sadd.s32 %s94, 1
      %s96 = scalar_select %p93, %s94, %s95
      %p99 = pneg %p93
      %p100 = scmp.eq.s32.totalorder %s16, 1
      %p101 = por %p99, %p100
      %p102 = scmp.ne.s32.totalorder %s94, %s97
      %p103 = scmp.eq.s32.totalorder %s16, 0
      %p104 = por %p102, %p103
      %p105 = scmp.ne.s32.totalorder %s94, %s97
      %p106 = scmp.eq.s32.totalorder %s21, 1
      %p107 = por %p105, %p106
      %p108 = scmp.ne.s32.totalorder %s97, %s98
      %p109 = scmp.eq.s32.totalorder %s21, 0
      %p110 = por %p108, %p109
      %p111 = scmp.ne.s32.totalorder %s97, %s98
      %p112 = scmp.eq.s32.totalorder %s22, 1
      %p113 = por %p111, %p112
      %p115 = scmp.ne.s32.totalorder %s98, %s114
      %p116 = scmp.eq.s32.totalorder %s22, 0
      %p117 = por %p115, %p116
      %p118 = scmp.le.s32.totalorder 1, %s16
      %p119 = scmp.lt.s32.totalorder %s16, 3
      %p120 = pnand %p118, %p119
      %p121 = pneg %p120
      // Predicated region
      $region9: #{tpu_custom_call.1} parent=5 // pred_check
        _
      $region10: #{tpu_custom_call.1} parent=5 // pred_check_branch
        %123 = sbr.rel (%p120) target = $region12
      $region11: #{tpu_custom_call.1} parent=5 // pred_region
        %s124 = ssub.s32 %s16, 1
        // Predicated region
        $region13: #{tpu_custom_call.1} parent=11 // pred_check
          %p125 = pneg %p63
        $region14: #{tpu_custom_call.1} parent=11 // pred_check_branch
          %127 = sbr.rel (%p125) target = $region16
        $region15: #{tpu_custom_call.1} parent=11 // pred_region
          %s129 = ssub.s32 64, 64
          %130 = vsyncadd [#allocation6], %s129
          %s132 = sshll.u32 [#allocation5], 4
          %s133 = int_to_ptr.vmem [resolvable:$true] %s132
          %135 = dma.hbm_to_vmem [thread:$0]  %s1, 64, %s133, [#allocation6]
        $region16: #{tpu_custom_call.1} parent=11 // pred_fallthru
          _
        // Predicated region
        $region17: #{tpu_custom_call.1} parent=11 // pred_check
          %p136 = pneg %p84
        $region18: #{tpu_custom_call.1} parent=11 // pred_check_branch
          %138 = sbr.rel (%p136) target = $region20
        $region19: #{tpu_custom_call.1} parent=11 // pred_region
          %s140 = ssub.s32 64, 64
          %141 = vsyncadd [#allocation6], %s140
          %s143 = sshll.u32 [#allocation7], 4
          %s144 = int_to_ptr.vmem [resolvable:$true] %s143
          %146 = dma.hbm_to_vmem [thread:$0]  %s2, 64, %s144, [#allocation6]
        $region20: #{tpu_custom_call.1} parent=11 // pred_fallthru
          _
      $region12: #{tpu_custom_call.1} parent=5 // pred_fallthru
        _
      %p147 = scmp.lt.s32.totalorder %s16, 2
      // Predicated region
      $region21: #{tpu_custom_call.1} parent=5 // pred_check
        %p148 = pneg %p147
      $region22: #{tpu_custom_call.1} parent=5 // pred_check_branch
        %150 = sbr.rel (%p148) target = $region24
      $region23: #{tpu_custom_call.1} parent=5 // pred_region
        // Predicated region
        $region25: #{tpu_custom_call.1} parent=23 // pred_check
          %p151 = pneg %p36
        $region26: #{tpu_custom_call.1} parent=23 // pred_check_branch
          %153 = sbr.rel (%p151) target = $region28
        $region27: #{tpu_custom_call.1} parent=23 // pred_region
          %s154 = sand.u32 %s26, 1
          %s155 = scalar_lea.sflag [#allocation3], %s154
          %s156 = sand.u32 %s26, 1
          %s157 = smul.addr %s156, 16
          %s158 = scalar_lea.vmem [#allocation2], %s157
          %s160 = ssub.s32 256, 256
          %161 = vsyncadd %s155, %s160
          %s162 = smul.addr %s16, 2
          %s163 = smul.addr %s162, 128
          %s164 = scalar_lea.hbm %s0, %s163
          %s166 = sshll.u32 %s158, 4
          %s167 = int_to_ptr.vmem [resolvable:$true] %s166
          %169 = dma.hbm_to_vmem [thread:$0]  %s164, 256, %s167, %s155
        $region28: #{tpu_custom_call.1} parent=23 // pred_fallthru
          _
      $region24: #{tpu_custom_call.1} parent=5 // pred_fallthru
        _
      %p170 = scmp.le.s32.totalorder 1, %s16
      %p171 = scmp.lt.s32.totalorder %s16, 3
      %p172 = pnand %p170, %p171
      %p173 = pneg %p172
      // Predicated region
      $region29: #{tpu_custom_call.1} parent=5 // pred_check
        _
      $region30: #{tpu_custom_call.1} parent=5 // pred_check_branch
        %175 = sbr.rel (%p172) target = $region32
      $region31: #{tpu_custom_call.1} parent=5 // pred_region
        %s176 = ssub.s32 %s16, 1
        %s177 = sand.u32 %s29, 1
        %s178 = scalar_lea.sflag [#allocation3], %s177
        %s179 = sand.u32 %s29, 1
        %s180 = smul.addr %s179, 16
        %s181 = scalar_lea.vmem [#allocation2], %s180
        // Predicated region
        $region33: #{tpu_custom_call.1} parent=31 // pred_check
          %p182 = pneg %p42
        $region34: #{tpu_custom_call.1} parent=31 // pred_check_branch
          %184 = sbr.rel (%p182) target = $region36
        $region35: #{tpu_custom_call.1} parent=31 // pred_region
          %185 = dma.done %s178, 256
        $region36: #{tpu_custom_call.1} parent=31 // pred_fallthru
          _
        // Predicated region
        $region37: #{tpu_custom_call.1} parent=31 // pred_check
          %p186 = pneg %p63
        $region38: #{tpu_custom_call.1} parent=31 // pred_check_branch
          %188 = sbr.rel (%p186) target = $region40
        $region39: #{tpu_custom_call.1} parent=31 // pred_region
          %189 = dma.done [#allocation6], 64
        $region40: #{tpu_custom_call.1} parent=31 // pred_fallthru
          _
        // Predicated region
        $region41: #{tpu_custom_call.1} parent=31 // pred_check
          %p190 = pneg %p84
        $region42: #{tpu_custom_call.1} parent=31 // pred_check_branch
          %192 = sbr.rel (%p190) target = $region44
        $region43: #{tpu_custom_call.1} parent=31 // pred_region
          %193 = dma.done [#allocation6], 64
        $region44: #{tpu_custom_call.1} parent=31 // pred_fallthru
          _
        %s194 = sand.u32 %s29, 1
        %s195 = scalar_lea.sflag [#allocation3], %s194
        %s196 = sand.u32 %s29, 1
        %s197 = smul.addr %s196, 16
        %s198 = scalar_lea.vmem [#allocation2], %s197
        %p199 = pneg %p42
        %p200 = pneg %p39
        %p201 = pneg %p63
        %p202 = pneg %p60
        %p203 = pneg %p84
        %p204 = pneg %p81
        %p205 = pneg %p110
        %p206 = pneg %p107
        %s207 = sand.u32 %s97, 1
        %s208 = scalar_lea.sflag [#allocation4], %s207
        %s209 = sand.u32 %s97, 1
        %s210 = smul.addr %s209, 16
        %s211 = scalar_lea.vmem [#allocation8], %s210
        %v213 = vld [vmem:[%s181] sm:$0xff]
        %v214 = vld [vmem:[%s181 + $0x8] sm:$0xff]
        %v215 = vlaneseq
        %v216 = vand.u32 %v215, 127
        %v217 = vadd.s32 %v216, 128
        %vm218 = vcmp.lt.s32.totalorder %v216, 0
        %v219 = vsub.s32 0, %v216
        %v220 = vsel %vm218, %v219, %v216
        %v221 = vshrl.u32 %v220, 4
        %v222 = vand.u32 %v220, 15
        %v223 = vsub.s32 0, %v222
        %v224 = vsel %vm218, %v223, %v222
        %vm225 = vcmp.lt.s32.totalorder %v217, 0
        %v226 = vsub.s32 0, %v217
        %v227 = vsel %vm225, %v226, %v217
        %v228 = vshrl.u32 %v227, 4
        %v229 = vand.u32 %v227, 15
        %v230 = vsub.s32 0, %v229
        %v231 = vsel %vm225, %v230, %v229
        %vm232 = vcmp.ne.s32.totalorder %v224, 0
        %vm233 = vcmp.ne.s32.totalorder %v231, 0
        %vm234 = vcmp.lt.s32.totalorder %v224, 0
        %vm235 = vcmp.lt.s32.totalorder %v231, 0
        %vm236 = vmand %vm234, %vm232
        %vm237 = vmand %vm235, %vm233
        %v238 = vadd.s32 %v224, 16
        %v239 = vadd.s32 %v231, 16
        %v240 = vsel %vm236, %v238, %v224
        %v241 = vsel %vm237, %v239, %v231
        %vm242 = vcmp.eq.s32.totalorder %v240, 0
        %vm243 = vcmp.eq.s32.totalorder %v241, 0
        %vm244 = vcmp.eq.s32.totalorder %v240, 15
        %vm245 = vcmp.eq.s32.totalorder %v241, 15
        %vm246 = vcmp.lt.s32.totalorder %v216, 16
        %vm247 = vcmp.lt.s32.totalorder %v217, 16
        %vm248 = vcmp.ge.s32.totalorder %v216, 240
        %vm249 = vcmp.ge.s32.totalorder %v217, 240
        %250 = vrot.lane.b32.xlu0 %v213, 127
        %v251 = vpop.permute.xlu0 %250
        %252 = vrot.lane.b32.xlu0 %v214, 127
        %v253 = vpop.permute.xlu0 %252
        %vm254 = vcmp.lt.s32.totalorder %v216, 127
        %v255 = vsel %vm254, %v251, %v253
        %v256 = vsel %vm254, %v253, %v251
        %257 = vrot.lane.b32.xlu0 %v213, 1
        %v258 = vpop.permute.xlu0 %257
        %259 = vrot.lane.b32.xlu0 %v214, 1
        %v260 = vpop.permute.xlu0 %259
        %vm261 = vcmp.lt.s32.totalorder %v216, 1
        %v262 = vsel %vm261, %v258, %v260
        %v263 = vsel %vm261, %v260, %v258
        %v264 = vsel %vm242, 1, 0
        %v265 = vsel %vm243, 1, 0
        %vm266 = vcmp.eq.s32.totalorder %v264, 1
        %vm267 = vcmp.eq.s32.totalorder %v265, 1
        %v268 = vsel %vm266, %v255, %v263
        %v269 = vsel %vm267, %v256, %v262
        %v270 = vsel %vm244, 1, 0
        %v271 = vsel %vm245, 1, 0
        %vm272 = vcmp.eq.s32.totalorder %v270, 1
        %vm273 = vcmp.eq.s32.totalorder %v271, 1
        %v274 = vsel %vm272, %v263, %v255
        %v275 = vsel %vm273, %v262, %v256
        %276 = vrot.lane.b32.xlu0 %v268, 112
        %v277 = vpop.permute.xlu0 %276
        %278 = vrot.lane.b32.xlu0 %v269, 112
        %v279 = vpop.permute.xlu0 %278
        %vm280 = vcmp.lt.s32.totalorder %v216, 112
        %v281 = vsel %vm280, %v277, %v279
        %v282 = vsel %vm280, %v279, %v277
        %283 = vrot.lane.b32.xlu0 %v268, 16
        %v284 = vpop.permute.xlu0 %283
        %285 = vrot.lane.b32.xlu0 %v269, 16
        %v286 = vpop.permute.xlu0 %285
        %v287 = vsel %vm246, %v284, %v286
        %v288 = vsel %vm246, %v286, %v284
        %v289 = vsel %vm246, 1, 0
        %v290 = vsel %vm247, 1, 0
        %vm291 = vcmp.eq.s32.totalorder %v289, 1
        %vm292 = vcmp.eq.s32.totalorder %v290, 1
        %v293 = vsel %vm291, %v281, %v288
        %v294 = vsel %vm292, %v282, %v287
        %v295 = vsel %vm248, 1, 0
        %v296 = vsel %vm249, 1, 0
        %vm297 = vcmp.eq.s32.totalorder %v295, 1
        %vm298 = vcmp.eq.s32.totalorder %v296, 1
        %v299 = vsel %vm297, %v288, %v281
        %v300 = vsel %vm298, %v287, %v282
        %301 = vrot.lane.b32.xlu0 %v213, 112
        %v302 = vpop.permute.xlu0 %301
        %303 = vrot.lane.b32.xlu0 %v214, 112
        %v304 = vpop.permute.xlu0 %303
        %v305 = vsel %vm280, %v302, %v304
        %v306 = vsel %vm280, %v304, %v302
        %307 = vrot.lane.b32.xlu0 %v213, 16
        %v308 = vpop.permute.xlu0 %307
        %309 = vrot.lane.b32.xlu0 %v214, 16
        %v310 = vpop.permute.xlu0 %309
        %v311 = vsel %vm246, %v308, %v310
        %v312 = vsel %vm246, %v310, %v308
        %v313 = vsel %vm291, %v305, %v312
        %v314 = vsel %vm292, %v306, %v311
        %v315 = vsel %vm297, %v312, %v305
        %v316 = vsel %vm298, %v311, %v306
        %317 = vrot.lane.b32.xlu0 %v274, 112
        %v318 = vpop.permute.xlu0 %317
        %319 = vrot.lane.b32.xlu0 %v275, 112
        %v320 = vpop.permute.xlu0 %319
        %v321 = vsel %vm280, %v318, %v320
        %v322 = vsel %vm280, %v320, %v318
        %323 = vrot.lane.b32.xlu0 %v274, 16
        %v324 = vpop.permute.xlu0 %323
        %325 = vrot.lane.b32.xlu0 %v275, 16
        %v326 = vpop.permute.xlu0 %325
        %v327 = vsel %vm246, %v324, %v326
        %v328 = vsel %vm246, %v326, %v324
        %v329 = vsel %vm291, %v321, %v328
        %v330 = vsel %vm292, %v322, %v327
        %v331 = vsel %vm297, %v328, %v321
        %v332 = vsel %vm298, %v327, %v322
        %v333 = vpack.c.bf16 %v313, %v293
        %v334 = vpack.c.bf16 %v314, %v294
        %v335 = vpack.c.bf16 %v268, %v329
        %v336 = vpack.c.bf16 %v269, %v330
        %v337 = vpack.c.bf16 %v274, %v213
        %v338 = vpack.c.bf16 %v275, %v214
        %v339 = vpack.c.bf16 %v315, %v299
        %v340 = vpack.c.bf16 %v316, %v300
        %v341 = vpack.c.bf16 %v331, %v331
        %v342 = vpack.c.bf16 %v332, %v332
        %v343 = vld [vmem:[#allocation5] sm:$0xf]
        %vm344 = vcmask 588800
        %v346 = vsel %vm344, %v343, 0
        %vm348 = vcmask 1043456
        %v350 = vsel %vm348, %v341, 0
        %v353 = vsel %vm348, %v342, 0
        %355 = vmatprep.subr.bf16.mxu0 0
        %356 = vmatpush1.bf16.msra.mxu0 0
        %357 = vmatprep.subr.bf16.mxu0 0
        %358 = vmatpush1.bf16.msra.mxu0 0
        %359 = vmatprep.subr.bf16.mxu0 0
        %360 = vmatpush1.bf16.msra.mxu0 0
        %361 = vmatprep.subr.bf16.mxu0 %v353
        %362 = vmatpush1.bf16.msra.mxu0 %v350
        %363 = vmatprep.subr.bf16.mxu0 %v340
        %364 = vmatpush1.bf16.msra.mxu0 %v339
        %365 = vmatprep.subr.bf16.mxu0 %v338
        %366 = vmatpush1.bf16.msra.mxu0 %v337
        %367 = vmatprep.subr.bf16.mxu0 %v336
        %368 = vmatpush1.bf16.msra.mxu0 %v335
        %369 = vmatprep.subr.bf16.mxu0 %v334
        %370 = vmatpush1.bf16.msra.mxu0 %v333
        %371 = vmatprep.subr.bf16.mxu0 0
        %372 = vmatpush2.bf16.msra.mxu0 0
        %373 = vmatprep.subr.bf16.mxu0 0
        %374 = vmatpush2.bf16.msra.mxu0 0
        %375 = vmatprep.subr.bf16.mxu0 0
        %376 = vmatpush2.bf16.msra.mxu0 0
        %377 = vmatprep.subr.bf16.mxu0 0
        %378 = vmatpush2.bf16.msra.mxu0 0
        %379 = vmatprep.subr.bf16.mxu0 0
        %380 = vmatpush2.bf16.msra.mxu0 0
        %381 = vmatprep.subr.bf16.mxu0 0
        %382 = vmatpush2.bf16.msra.mxu0 0
        %383 = vmatprep.subr.bf16.mxu0 0
        %384 = vmatpush2.bf16.msra.mxu0 0
        %385 = vmatprep.subr.bf16.mxu0 0
        %386 = vmatpush2.bf16.msra.mxu0 0
        %387 = vmatprep.mubr.bf16.mxu0 0
        %388 = vmatmul.mubr.bf16.gmra.mxu0 %v346
        %v389 = vpop.f32.mrf.mxu0
        %v390 = vadd.f32 0.0, %v389
        %v391 = vpop.f32.mrf.mxu0
        %v392 = vadd.f32 0.0, %v391
        %v393 = vpop.f32.mrf.mxu0
        %v394 = vpop.f32.mrf.mxu0
        %395 = vdwg.mxu0
        %v396 = vadd.f32 %v390, %v392
        %397 = vadd.xlane.f32.xlu0 %v396
        %v398 = vpop.xlane.xlu0 %397
        %v399 = vmul.f32 %v390, %v390
        %v400 = vmul.f32 %v392, %v392
        %v401 = vadd.f32 %v399, %v400
        %402 = vadd.xlane.f32.xlu0 %v401
        %v403 = vpop.xlane.xlu0 %402
        %v404 = vmul.f32 %v398, 0.00390625
        %v405 = vmul.f32 %v403, 0.00390625
        %v406 = vmul.f32 %v404, %v404
        %v407 = vsub.f32 %v405, %v406
        %v408 = vmax.f32 %v407, 0.0
        %v409 = vsub.f32 %v390, %v404
        %v410 = vsub.f32 %v392, %v404
        %v411 = vadd.f32 %v408, 1e-05
        %v412 = vrsqrt.pop %v411
        %v413 = vmul.f32 %v409, %v412
        %v414 = vmul.f32 %v410, %v412
        %v415 = vmax.f32 %v413, 0.0
        %v416 = vmax.f32 %v414, 0.0
        %417 = vrot.lane.b32.xlu0 %v415, 127
        %v418 = vpop.permute.xlu0 %417
        %419 = vrot.lane.b32.xlu0 %v416, 127
        %v420 = vpop.permute.xlu0 %419
        %v421 = vsel %vm254, %v418, %v420
        %v422 = vsel %vm254, %v420, %v418
        %423 = vrot.lane.b32.xlu0 %v415, 1
        %v424 = vpop.permute.xlu0 %423
        %425 = vrot.lane.b32.xlu0 %v416, 1
        %v426 = vpop.permute.xlu0 %425
        %v427 = vsel %vm261, %v424, %v426
        %v428 = vsel %vm261, %v426, %v424
        %v429 = vsel %vm266, %v421, %v428
        %v430 = vsel %vm267, %v422, %v427
        %v431 = vsel %vm272, %v428, %v421
        %v432 = vsel %vm273, %v427, %v422
        %433 = vrot.lane.b32.xlu0 %v429, 112
        %v434 = vpop.permute.xlu0 %433
        %435 = vrot.lane.b32.xlu0 %v430, 112
        %v436 = vpop.permute.xlu0 %435
        %v437 = vsel %vm280, %v434, %v436
        %v438 = vsel %vm280, %v436, %v434
        %439 = vrot.lane.b32.xlu0 %v429, 16
        %v440 = vpop.permute.xlu0 %439
        %441 = vrot.lane.b32.xlu0 %v430, 16
        %v442 = vpop.permute.xlu0 %441
        %v443 = vsel %vm246, %v440, %v442
        %v444 = vsel %vm246, %v442, %v440
        %v445 = vsel %vm291, %v437, %v444
        %v446 = vsel %vm292, %v438, %v443
        %v447 = vsel %vm297, %v444, %v437
        %v448 = vsel %vm298, %v443, %v438
        %449 = vrot.lane.b32.xlu0 %v415, 112
        %v450 = vpop.permute.xlu0 %449
        %451 = vrot.lane.b32.xlu0 %v416, 112
        %v452 = vpop.permute.xlu0 %451
        %v453 = vsel %vm280, %v450, %v452
        %v454 = vsel %vm280, %v452, %v450
        %455 = vrot.lane.b32.xlu0 %v415, 16
        %v456 = vpop.permute.xlu0 %455
        %457 = vrot.lane.b32.xlu0 %v416, 16
        %v458 = vpop.permute.xlu0 %457
        %v459 = vsel %vm246, %v456, %v458
        %v460 = vsel %vm246, %v458, %v456
        %v461 = vsel %vm291, %v453, %v460
        %v462 = vsel %vm292, %v454, %v459
        %v463 = vsel %vm297, %v460, %v453
        %v464 = vsel %vm298, %v459, %v454
        %465 = vrot.lane.b32.xlu0 %v431, 112
        %v466 = vpop.permute.xlu0 %465
        %467 = vrot.lane.b32.xlu0 %v432, 112
        %v468 = vpop.permute.xlu0 %467
        %v469 = vsel %vm280, %v466, %v468
        %v470 = vsel %vm280, %v468, %v466
        %471 = vrot.lane.b32.xlu0 %v431, 16
        %v472 = vpop.permute.xlu0 %471
        %473 = vrot.lane.b32.xlu0 %v432, 16
        %v474 = vpop.permute.xlu0 %473
        %v475 = vsel %vm246, %v472, %v474
        %v476 = vsel %vm246, %v474, %v472
        %v477 = vsel %vm291, %v469, %v476
        %v478 = vsel %vm292, %v470, %v475
        %v479 = vsel %vm297, %v476, %v469
        %v480 = vsel %vm298, %v475, %v470
        %v481 = vpack.c.bf16 %v461, %v445
        %v482 = vpack.c.bf16 %v462, %v446
        %v483 = vpack.c.bf16 %v429, %v477
        %v484 = vpack.c.bf16 %v430, %v478
        %v485 = vpack.c.bf16 %v431, %v415
        %v486 = vpack.c.bf16 %v432, %v416
        %v487 = vpack.c.bf16 %v463, %v447
        %v488 = vpack.c.bf16 %v464, %v448
        %v489 = vpack.c.bf16 %v479, %v479
        %v490 = vpack.c.bf16 %v480, %v480
        %v491 = vld [vmem:[#allocation7] sm:$0xf]
        %v493 = vsel %vm344, %v491, 0
        %v496 = vsel %vm348, %v489, 0
        %v499 = vsel %vm348, %v490, 0
        %501 = vmatprep.subr.bf16.mxu0 0
        %502 = vmatpush1.bf16.msra.mxu0 0
        %503 = vmatprep.subr.bf16.mxu0 0
        %504 = vmatpush1.bf16.msra.mxu0 0
        %505 = vmatprep.subr.bf16.mxu0 0
        %506 = vmatpush1.bf16.msra.mxu0 0
        %507 = vmatprep.subr.bf16.mxu0 %v499
        %508 = vmatpush1.bf16.msra.mxu0 %v496
        %509 = vmatprep.subr.bf16.mxu0 %v488
        %510 = vmatpush1.bf16.msra.mxu0 %v487
        %511 = vmatprep.subr.bf16.mxu0 %v486
        %512 = vmatpush1.bf16.msra.mxu0 %v485
        %513 = vmatprep.subr.bf16.mxu0 %v484
        %514 = vmatpush1.bf16.msra.mxu0 %v483
        %515 = vmatprep.subr.bf16.mxu0 %v482
        %516 = vmatpush1.bf16.msra.mxu0 %v481
        %517 = vmatprep.subr.bf16.mxu0 0
        %518 = vmatpush2.bf16.msra.mxu0 0
        %519 = vmatprep.subr.bf16.mxu0 0
        %520 = vmatpush2.bf16.msra.mxu0 0
        %521 = vmatprep.subr.bf16.mxu0 0
        %522 = vmatpush2.bf16.msra.mxu0 0
        %523 = vmatprep.subr.bf16.mxu0 0
        %524 = vmatpush2.bf16.msra.mxu0 0
        %525 = vmatprep.subr.bf16.mxu0 0
        %526 = vmatpush2.bf16.msra.mxu0 0
        %527 = vmatprep.subr.bf16.mxu0 0
        %528 = vmatpush2.bf16.msra.mxu0 0
        %529 = vmatprep.subr.bf16.mxu0 0
        %530 = vmatpush2.bf16.msra.mxu0 0
        %531 = vmatprep.subr.bf16.mxu0 0
        %532 = vmatpush2.bf16.msra.mxu0 0
        %533 = vmatprep.mubr.bf16.mxu0 0
        %534 = vmatmul.mubr.bf16.gmra.mxu0 %v493
        %v535 = vpop.f32.mrf.mxu0
        %v536 = vadd.f32 0.0, %v535
        %v537 = vpop.f32.mrf.mxu0
        %v538 = vadd.f32 0.0, %v537
        %v539 = vpop.f32.mrf.mxu0
        %v540 = vpop.f32.mrf.mxu0
        %541 = vdwg.mxu0
        %v542 = vadd.f32 %v536, %v538
        %543 = vadd.xlane.f32.xlu0 %v542
        %v544 = vpop.xlane.xlu0 %543
        %v545 = vmul.f32 %v536, %v536
        %v546 = vmul.f32 %v538, %v538
        %v547 = vadd.f32 %v545, %v546
        %548 = vadd.xlane.f32.xlu0 %v547
        %v549 = vpop.xlane.xlu0 %548
        %v550 = vmul.f32 %v544, 0.00390625
        %v551 = vmul.f32 %v549, 0.00390625
        %v552 = vmul.f32 %v550, %v550
        %v553 = vsub.f32 %v551, %v552
        %v554 = vmax.f32 %v553, 0.0
        %v555 = vsub.f32 %v536, %v550
        %v556 = vsub.f32 %v538, %v550
        %v557 = vadd.f32 %v554, 1e-05
        %v558 = vrsqrt.pop %v557
        %v559 = vmul.f32 %v555, %v558
        %v560 = vmul.f32 %v556, %v558
        %v561 = vadd.f32 %v213, %v559
        %v562 = vadd.f32 %v214, %v560
        %563 = vst [vmem:[%s211] sm:$0xff] %v561
        %564 = vst [vmem:[%s211 + $0x8] sm:$0xff] %v562
        %s565 = sand.u32 %s97, 1
        %s566 = scalar_lea.sflag [#allocation4], %s565
        %s567 = sand.u32 %s97, 1
        %s568 = smul.addr %s567, 16
        %s569 = scalar_lea.vmem [#allocation8], %s568
        // Predicated region
        $region45: #{tpu_custom_call.1} parent=31 // pred_check
          %p570 = pneg %p107
        $region46: #{tpu_custom_call.1} parent=31 // pred_check_branch
          %572 = sbr.rel (%p570) target = $region48
        $region47: #{tpu_custom_call.1} parent=31 // pred_region
          %s574 = ssub.s32 256, 256
          %575 = vsyncadd %s566, %s574
          %s576 = smul.addr %s21, 2
          %s577 = smul.addr %s576, 128
          %s578 = scalar_lea.hbm %s3, %s577
          %s580 = sshll.u32 %s569, 4
          %s581 = int_to_ptr.vmem [resolvable:$true] %s580
          %583 = dma.vmem_to_hbm [thread:$0]  %s581, 256, %s578, %s566
        $region48: #{tpu_custom_call.1} parent=31 // pred_fallthru
          _
      $region32: #{tpu_custom_call.1} parent=5 // pred_fallthru
        _
      %p584 = scmp.le.s32.totalorder 2, %s16
      // Predicated region
      $region49: #{tpu_custom_call.1} parent=5 // pred_check
        %p585 = pneg %p584
      $region50: #{tpu_custom_call.1} parent=5 // pred_check_branch
        %587 = sbr.rel (%p585) target = $region52
      $region51: #{tpu_custom_call.1} parent=5 // pred_region
        %s588 = ssub.s32 %s16, 2
        // Predicated region
        $region53: #{tpu_custom_call.1} parent=51 // pred_check
          %p589 = pneg %p113
        $region54: #{tpu_custom_call.1} parent=51 // pred_check_branch
          %591 = sbr.rel (%p589) target = $region56
        $region55: #{tpu_custom_call.1} parent=51 // pred_region
          %s592 = sand.u32 %s98, 1
          %s593 = scalar_lea.sflag [#allocation4], %s592
          %s594 = sand.u32 %s98, 1
          %s595 = smul.addr %s594, 16
          %s596 = scalar_lea.vmem [#allocation8], %s595
          %597 = dma.done %s593, 256
        $region56: #{tpu_custom_call.1} parent=51 // pred_fallthru
          _
      $region52: #{tpu_custom_call.1} parent=5 // pred_fallthru
        _
    $region6: #{tpu_custom_call.1} parent=1 // loop_footer
      %s20 = sadd.s32 1, %s16
    $region7: #{tpu_custom_call.1} parent=1 // loop_footer_branch
      %15 = sbr.rel target = $region3
    $region8: #{tpu_custom_call.1} parent=1 // loop_exit
      _
    %598 = vsyncpa [#allocation3], 1
    %s599 = scalar_lea.sflag [#allocation3], 1
    %600 = vsyncpa %s599, 1
    %601 = vsyncpa [#allocation6], 1
    %602 = vsyncpa [#allocation4], 1
    %s603 = scalar_lea.sflag [#allocation4], 1
    %604 = vsyncpa %s603, 1

</llo_original>
